<compile_context>
chip_gen: v6e
topology: v6e:2x2x1
jax: 0.10.0
libtpu: 0.0.40
codegen_flags: <defaults>
</compile_context>

<pallas_src>
import functools

import jax
import jax.numpy as jnp
from jax.experimental import pallas as pl
from jax.experimental.pallas import tpu as pltpu


_X_TILE_VMEM_BUDGET = 16 * 1024 * 1024   # bytes for the double-buffered x tile
_MAX_BLOCK_ROWS = 8192


def _round_up(x, m):
    return (x + m - 1) // m * m


@functools.lru_cache(maxsize=1)
def _is_v7x():
    # v7x is the only generation with 2 TensorCores per chip; on v5e/v6e the
    # grid is a purely serial loop, so forcing >=2 grid steps is pure overhead.
    try:
        kind = jax.devices()[0].device_kind.lower()
    except Exception:
        return False
    return "v7" in kind


def _gated_attention_kernel(x_ref, wab_ref, bab_ref, wc_ref, bc_ref, a_out_ref,
                            *, d, c_is_one):
    """One row tile: fused gate projection, gated combine, score head."""
    # Fused attention_a / attention_b projection: one [rows, L] @ [L, 2D] MXU
    # matmul with f32 accumulation.  The second half of Wab / bab was pre-scaled
    # by 0.5 in the wrapper so the whole z block goes through a single tanh.
    z = jnp.dot(x_ref[...], wab_ref[...], preferred_element_type=jnp.float32)
    z = z + bab_ref[...].astype(jnp.float32)

    # One full-width EUP pass instead of two half-width tanh/sigmoid calls:
    #   a          = tanh(z_a)
    #   sigmoid(z) = 0.5 * tanh(0.5 * z) + 0.5   (the 0.5 is folded into Wb/bb)
    t = jnp.tanh(z)
    gated = t[:, :d] * (0.5 * t[:, d:] + 0.5)            # VPU, f32

    if c_is_one:
        # n_classes == 1: VPU multiply + lane reduce; avoids a degenerate
        # (D x 1) matvec through the MXU result path.
        scores = jnp.sum(gated * wc_ref[...].astype(jnp.float32),
                         axis=-1, keepdims=True)
    else:
        scores = jnp.dot(gated, wc_ref[...].astype(jnp.float32),
                         preferred_element_type=jnp.float32)
    a_out_ref[...] = (scores + bc_ref[...].astype(jnp.float32)).astype(a_out_ref.dtype)


@functools.partial(jax.jit, static_argnames=("block_rows", "matmul_dtype"))
def gated_attention_forward(x, wa, ba, wb, bb, wc, bc, *,
                            block_rows=None, matmul_dtype=None):
    """Pallas wrapper.

    x: [N, L] or [1, N, L].  Weights pre-transposed: wa/wb [L, D], wc [D, C].
    Returns (A, x) matching GatedAttentionNet.forward.
    """
    if x.ndim == 3:
        x = jnp.squeeze(x, axis=0)
    n, l = x.shape
    d = wa.shape[1]
    c = wc.shape[1]
    x_orig = x

    # Fuse the two gate projections into one [L, 2D] weight / [1, 2D] bias.
    # The sigmoid branch is pre-scaled by 0.5 (exact power-of-2 scale).
    wab = jnp.concatenate([wa, 0.5 * wb], axis=1)             # (L, 2D)
    bab = jnp.concatenate([ba, 0.5 * bb]).reshape(1, 2 * d)   # (1, 2D)
    bc2 = bc.reshape(1, c)

    c_is_one = (c == 1)
    wc_arg = wc.reshape(1, d) if c_is_one else wc              # row-major safe

    # Optional narrow-HBM path: cast the big arrays in the wrapper so DMA bytes
    # actually shrink (an in-kernel astype would not); accumulation stays f32.
    if matmul_dtype is not None:
        x = x.astype(matmul_dtype)
        wab = wab.astype(matmul_dtype)

    # Tiny-N handling only: keep the sublane dim a multiple of 8.
    if n < 8:
        x = jnp.pad(x, ((0, 8 - n), (0, 0)))
    n_k = max(n, 8)

    # Row tile from a VMEM budget (multiple of 8, never past the problem size).
    itemsize = x.dtype.itemsize
    l_pad = _round_up(l, 128)                    # lane-padded row footprint
    c_pad = _round_up(c, 128)
    if block_rows is None:
        bm = _X_TILE_VMEM_BUDGET // (2 * l_pad * itemsize)   # 2 = double buffer
        bm = min(bm, _MAX_BLOCK_ROWS)
    else:
        bm = block_rows
    bm = max(8, (bm // 8) * 8)
    bm = min(bm, (n_k // 8) * 8)

    # v7x only: two TensorCores -> want >=2 steps on the "parallel" grid axis.
    if _is_v7x() and pl.cdiv(n_k, bm) < 2 and bm > 8:
        bm = max(8, _round_up(pl.cdiv(bm, 2), 8))

    grid = (pl.cdiv(n_k, bm),)   # ragged last block handled by Pallas; no jnp.pad

    # VMEM limit: double-buffered tiles + resident weights + slack, gen-aware cap.
    out_itemsize = x_orig.dtype.itemsize
    vmem_est = (2 * bm * l_pad * itemsize                                   # x
                + 2 * bm * c_pad * out_itemsize                             # A
                + 2 * _round_up(l, 8) * _round_up(2 * d, 128) * itemsize    # Wab
                + 4 * 8 * _round_up(2 * d, 128) * 4                         # bab
                + 2 * _round_up(wc_arg.shape[0], 8)
                    * _round_up(wc_arg.shape[1], 128) * 4                   # Wc
                + 4 * 8 * c_pad * 4)                                        # bc
    vmem_cap = (56 if _is_v7x() else 100) * 1024 * 1024
    vmem_limit = min(max(int(vmem_est * 1.25) + (1 << 20), 32 * 1024 * 1024),
                     vmem_cap)

    kernel = functools.partial(_gated_attention_kernel, d=d, c_is_one=c_is_one)

    a_out = pl.pallas_call(
        kernel,
        out_shape=jax.ShapeDtypeStruct((n_k, c), x_orig.dtype),
        grid_spec=pltpu.PrefetchScalarGridSpec(
            num_scalar_prefetch=0,
            grid=grid,
            in_specs=[
                pl.BlockSpec((bm, l), lambda i: (i, 0)),        # x tile (only tiled input)
                pl.BlockSpec((l, 2 * d), lambda i: (0, 0)),     # fused Wab (resident)
                pl.BlockSpec((1, 2 * d), lambda i: (0, 0)),     # fused bias
                pl.BlockSpec(wc_arg.shape, lambda i: (0, 0)),   # Wc
                pl.BlockSpec((1, c), lambda i: (0, 0)),         # bc
            ],
            out_specs=pl.BlockSpec((bm, c), lambda i: (i, 0)),  # A
        ),
        compiler_params=pltpu.CompilerParams(
            dimension_semantics=("parallel",),
            vmem_limit_bytes=vmem_limit,
        ),
    )(x, wab, bab, wc_arg, bc2)

    A = a_out[:n] if n_k != n else a_out
    # x passthrough handled in the wrapper: no redundant HBM writeback.
    return A, x_orig


def _reference(x, wa, ba, wb, bb, wc, bc):
    if x.ndim == 3:
        x = jnp.squeeze(x, axis=0)
    a = jnp.tanh(x @ wa + ba)
    b = jax.nn.sigmoid(x @ wb + bb)
    A = (a * b) @ wc + bc
    return A, x


def _make_params(key, l, d, c):
    ka, kab, kb, kbb, kc, kcb = jax.random.split(key, 6)
    wa = jax.random.normal(ka, (l, d), dtype=jnp.float32) * 0.05
    ba = jax.random.normal(kab, (d,), dtype=jnp.float32) * 0.05
    wb = jax.random.normal(kb, (l, d), dtype=jnp.float32) * 0.05
    bb = jax.random.normal(kbb, (d,), dtype=jnp.float32) * 0.05
    wc = jax.random.normal(kc, (d, c), dtype=jnp.float32) * 0.05
    bc = jax.random.normal(kcb, (c,), dtype=jnp.float32) * 0.05
    return wa, ba, wb, bb, wc, bc


if __name__ == "__main__":
    key = jax.random.PRNGKey(0)

    # Case 1: small shapes consistent with the module, n_classes=1 (VPU head),
    # 3-D input that gets squeezed, auto row tile.
    N, L, D, C = 8, 32, 16, 1
    k1, k2, k3, kp1, kp2, kp3 = jax.random.split(key, 6)
    x1 = jax.random.normal(k1, (1, N, L), dtype=jnp.float32)
    p1 = _make_params(kp1, L, D, C)
    A1, x1_out = gated_attention_forward(x1, *p1)
    jax.block_until_ready((A1, x1_out))
    A1_ref, x1_ref = _reference(x1, *p1)
    assert A1.shape == (N, C) and x1_out.shape == (N, L)
    assert jnp.allclose(A1, A1_ref, atol=1e-5, rtol=1e-5)
    assert jnp.allclose(x1_out, x1_ref)

    # Case 2: ragged N with explicit small tile -> multiple grid steps, ragged
    # last block (no jnp.pad), n_classes=2 (MXU head path).
    N2, L2, D2, C2 = 200, 32, 16, 2
    x2 = jax.random.normal(k2, (N2, L2), dtype=jnp.float32)
    p2 = _make_params(kp2, L2, D2, C2)
    A2, x2_out = gated_attention_forward(x2, *p2, block_rows=64)
    jax.block_until_ready((A2, x2_out))
    A2_ref, x2_ref = _reference(x2, *p2)
    assert A2.shape == (N2, C2) and x2_out.shape == (N2, L2)
    assert jnp.allclose(A2, A2_ref, atol=1e-5, rtol=1e-5)
    assert jnp.allclose(x2_out, x2_ref)

    # Case 3: ragged N with the auto VMEM-budget tile (tile capped to 136 rows,
    # last block has a single valid row), n_classes=1.
    N3, L3, D3, C3 = 137, 64, 32, 1
    x3 = jax.random.normal(k3, (N3, L3), dtype=jnp.float32)
    p3 = _make_params(kp3, L3, D3, C3)
    A3, x3_out = gated_attention_forward(x3, *p3)
    jax.block_until_ready((A3, x3_out))
    A3_ref, x3_ref = _reference(x3, *p3)
    assert A3.shape == (N3, C3) and x3_out.shape == (N3, L3)
    assert jnp.allclose(A3, A3_ref, atol=1e-5, rtol=1e-5)
    assert jnp.allclose(x3_out, x3_ref)

    print("KERNEL_OK")
</pallas_src>

<mosaic_0001>
module attributes {stable_mosaic.version = 11 : i64} {
  func.func @_gated_attention_kernel(%arg0: i32, %arg1: memref<8x32xf32, #tpu.memory_space<vmem>>, %arg2: memref<32x32xf32, #tpu.memory_space<vmem>>, %arg3: memref<1x32xf32, #tpu.memory_space<vmem>>, %arg4: memref<1x16xf32, #tpu.memory_space<vmem>>, %arg5: memref<1x1xf32, #tpu.memory_space<vmem>>, %arg6: memref<8x1xf32, #tpu.memory_space<vmem>>) attributes {dimension_semantics = [#tpu.dimension_semantics<parallel>], iteration_bounds = array<i64: 1>, scalar_prefetch = 0 : i64, scratch_operands = 0 : i64, tpu.core_type = #tpu.core_type<tc>, window_params = [{transform_indices = @transform_0, window_bounds = array<i64: 8, 32>}, {pipeline_mode = #tpu.pipeline_mode<synchronous>, transform_indices = @transform_1, window_bounds = array<i64: 32, 32>}, {pipeline_mode = #tpu.pipeline_mode<synchronous>, transform_indices = @transform_2, window_bounds = array<i64: 1, 32>}, {pipeline_mode = #tpu.pipeline_mode<synchronous>, transform_indices = @transform_3, window_bounds = array<i64: 1, 16>}, {pipeline_mode = #tpu.pipeline_mode<synchronous>, transform_indices = @transform_4, window_bounds = array<i64: 1, 1>}, {transform_indices = @transform_5, window_bounds = array<i64: 8, 1>}]} {
    %c0 = arith.constant 0 : index
    %c0_0 = arith.constant 0 : index
    %0 = vector.load %arg1[%c0, %c0_0] : memref<8x32xf32, #tpu.memory_space<vmem>>, vector<8x32xf32>
    %c0_1 = arith.constant 0 : index
    %c0_2 = arith.constant 0 : index
    %1 = vector.load %arg2[%c0_1, %c0_2] : memref<32x32xf32, #tpu.memory_space<vmem>>, vector<32x32xf32>
    %cst = arith.constant dense<0.000000e+00> : vector<8x32xf32>
    %2 = tpu.matmul %0, %1, %cst {dimension_numbers = #tpu.dot_dimension_numbers<[1], [0], [0], [1], [0, 0, 1, 1], [], []>} : vector<8x32xf32>, vector<32x32xf32>, vector<8x32xf32> -> vector<8x32xf32>
    %c0_3 = arith.constant 0 : index
    %c0_4 = arith.constant 0 : index
    %3 = vector.load %arg3[%c0_3, %c0_4] : memref<1x32xf32, #tpu.memory_space<vmem>>, vector<1x32xf32>
    %4 = vector.broadcast %3 : vector<1x32xf32> to vector<8x32xf32>
    %5 = arith.addf %2, %4 : vector<8x32xf32>
    %6 = math.tanh %5 : vector<8x32xf32>
    %7 = vector.extract_strided_slice %6 {offsets = [0, 0], sizes = [8, 16], strides = [1, 1]} : vector<8x32xf32> to vector<8x16xf32>
    %8 = vector.extract_strided_slice %6 {offsets = [0, 16], sizes = [8, 16], strides = [1, 1]} : vector<8x32xf32> to vector<8x16xf32>
    %cst_5 = arith.constant 5.000000e-01 : f32
    %9 = vector.broadcast %cst_5 : f32 to vector<8x16xf32>
    %10 = arith.mulf %9, %8 : vector<8x16xf32>
    %cst_6 = arith.constant 5.000000e-01 : f32
    %11 = vector.broadcast %cst_6 : f32 to vector<8x16xf32>
    %12 = arith.addf %10, %11 : vector<8x16xf32>
    %13 = arith.mulf %7, %12 : vector<8x16xf32>
    %c0_7 = arith.constant 0 : index
    %c0_8 = arith.constant 0 : index
    %14 = vector.load %arg4[%c0_7, %c0_8] : memref<1x16xf32, #tpu.memory_space<vmem>>, vector<1x16xf32>
    %15 = vector.broadcast %14 : vector<1x16xf32> to vector<8x16xf32>
    %16 = arith.mulf %13, %15 : vector<8x16xf32>
    %cst_9 = arith.constant dense<0.000000e+00> : vector<8xf32>
    %17 = vector.multi_reduction <add>, %16, %cst_9 [1] : vector<8x16xf32> to vector<8xf32>
    %18 = vector.shape_cast %17 : vector<8xf32> to vector<8x1xf32>
    %c0_10 = arith.constant 0 : index
    %c0_11 = arith.constant 0 : index
    %19 = vector.load %arg5[%c0_10, %c0_11] : memref<1x1xf32, #tpu.memory_space<vmem>>, vector<1x1xf32>
    %20 = vector.broadcast %19 : vector<1x1xf32> to vector<8x1xf32>
    %21 = arith.addf %18, %20 : vector<8x1xf32>
    %c0_12 = arith.constant 0 : index
    %c0_13 = arith.constant 0 : index
    %22 = vector.load %arg6[%c0_12, %c0_13] : memref<8x1xf32, #tpu.memory_space<vmem>>, vector<8x1xf32>
    tpu.vector_store %arg6[%c0_12, %c0_13], %21 {strides = array<i32>} : memref<8x1xf32, #tpu.memory_space<vmem>>, vector<8x1xf32>,
    return
  }
  func.func @transform_0(%arg0: i32) -> (i32, i32) {
    %c0_i32 = arith.constant 0 : i32
    %c0_i32_0 = arith.constant 0 : i32
    return %arg0, %c0_i32 : i32, i32
  }
  func.func @transform_1(%arg0: i32) -> (i32, i32) {
    %c0_i32 = arith.constant 0 : i32
    %c0_i32_0 = arith.constant 0 : i32
    %c0_i32_1 = arith.constant 0 : i32
    return %c0_i32, %c0_i32_0 : i32, i32
  }
  func.func @transform_2(%arg0: i32) -> (i32, i32) {
    %c0_i32 = arith.constant 0 : i32
    %c0_i32_0 = arith.constant 0 : i32
    %c0_i32_1 = arith.constant 0 : i32
    return %c0_i32, %c0_i32_0 : i32, i32
  }
  func.func @transform_3(%arg0: i32) -> (i32, i32) {
    %c0_i32 = arith.constant 0 : i32
    %c0_i32_0 = arith.constant 0 : i32
    %c0_i32_1 = arith.constant 0 : i32
    return %c0_i32, %c0_i32_0 : i32, i32
  }
  func.func @transform_4(%arg0: i32) -> (i32, i32) {
    %c0_i32 = arith.constant 0 : i32
    %c0_i32_0 = arith.constant 0 : i32
    %c0_i32_1 = arith.constant 0 : i32
    return %c0_i32, %c0_i32_0 : i32, i32
  }
  func.func @transform_5(%arg0: i32) -> (i32, i32) {
    %c0_i32 = arith.constant 0 : i32
    %c0_i32_0 = arith.constant 0 : i32
    return %arg0, %c0_i32 : i32, i32
  }
}

</mosaic_0001>

<llo_original>
// kernel: gated_attention_forward.1
$region0: #{gated_attention_forward.1}
  #allocation0 [shape = 'u32[]', space=smem, size = 0x4, offset = 0x4, fixed_abs, tag = 'smem constant byte address 0x4 - core index']
  #allocation1 [shape = 'u32[144,128]{1,0:T(1,128)}', space=vmem, size = 0x12000, scoped, tag = 'internal scratch']
  #allocation2 [shape = 'f32[1,1]{1,0:T(1,128)S(1)}', space=vmem, size = 0x200, scoped, tag = 'scoped memory for gated_attention_forward.1']
  %s0 = inlined_call_operand.vmem [shape: f32[8,32], index: 0, kind: input, shape index: {}]
  %s1 = inlined_call_operand.vmem [shape: f32[32,32], index: 1, kind: input, shape index: {}]
  %s2 = inlined_call_operand.vmem [shape: f32[1,32], index: 2, kind: input, shape index: {}]
  %s3 = inlined_call_operand.vmem [shape: f32[1,16], index: 3, kind: input, shape index: {}]
  %s4 = inlined_call_operand.<no memory space> [shape: f32[1,1], index: 4, kind: input, shape index: {}]
  %s5 = inlined_call_operand.vmem [shape: f32[8,1], index: 5, kind: output, shape index: {}]
  %s6 = sld [smem:[#allocation0]]
  $region30: #{gated_attention_forward.1} parent=0
    _
  %s8 = ssub.s32 1, %s6
  %s9 = scalar_select 0, %s8, %s6
  %v10 = vstv %s4
  %11 = vst [vmem:[#allocation2] sm:$0x1] %v10
  // Predicated region
  $region2: #{gated_attention_forward.1} parent=0 // pred_check
    _
  $region3: #{gated_attention_forward.1} parent=0 // pred_check_branch
    %13 = sbr.rel (0) target = $region5
  $region4: #{gated_attention_forward.1} parent=0 // pred_region
    _
  $region5: #{gated_attention_forward.1} parent=0 // pred_fallthru
    _
  // Predicated region
  $region6: #{gated_attention_forward.1} parent=0 // pred_check
    _
  $region7: #{gated_attention_forward.1} parent=0 // pred_check_branch
    %15 = sbr.rel (0) target = $region9
  $region8: #{gated_attention_forward.1} parent=0 // pred_region
    _
  $region9: #{gated_attention_forward.1} parent=0 // pred_fallthru
    _
  // Predicated region
  $region10: #{gated_attention_forward.1} parent=0 // pred_check
    _
  $region11: #{gated_attention_forward.1} parent=0 // pred_check_branch
    %17 = sbr.rel (0) target = $region13
  $region12: #{gated_attention_forward.1} parent=0 // pred_region
    _
  $region13: #{gated_attention_forward.1} parent=0 // pred_fallthru
    _
  // Predicated region
  $region14: #{gated_attention_forward.1} parent=0 // pred_check
    _
  $region15: #{gated_attention_forward.1} parent=0 // pred_check_branch
    %19 = sbr.rel (0) target = $region17
  $region16: #{gated_attention_forward.1} parent=0 // pred_region
    _
  $region17: #{gated_attention_forward.1} parent=0 // pred_fallthru
    _
  // Predicated region
  $region18: #{gated_attention_forward.1} parent=0 // pred_check
    _
  $region19: #{gated_attention_forward.1} parent=0 // pred_check_branch
    %21 = sbr.rel (0) target = $region21
  $region20: #{gated_attention_forward.1} parent=0 // pred_region
    _
  $region21: #{gated_attention_forward.1} parent=0 // pred_fallthru
    _
  %v22 = vld [vmem:[%s0] sm:$0xff]
  %v23 = vld [vmem:[%s1] sm:$0xff]
  %v24 = vld [vmem:[%s1 + $0x8] sm:$0xff]
  %v25 = vld [vmem:[%s1 + $0x10] sm:$0xff]
  %v26 = vld [vmem:[%s1 + $0x18] sm:$0xff]
  %v27 = vld [vmem:[%s2] sm:$0x1]
  %v29 = vlaneseq
  %v30 = vshrl.u32 %v29, 7
  %v31 = vsub.s32 0, %v30
  %v32 = vrot.slane %v27, %v31
  %vm34 = vcmask 261120
  %v36 = vsel %vm34, %v22, 0
  %38 = vmatprep.subr.mxu0 0.0
  %39 = vmatpush1.msra.mxu0 0.0
  %40 = vmatprep.subr.mxu0 0.0
  %41 = vmatpush1.msra.mxu0 0.0
  %42 = vmatprep.subr.mxu0 0.0
  %43 = vmatpush1.msra.mxu0 0.0
  %44 = vmatprep.subr.mxu0 0.0
  %45 = vmatpush1.msra.mxu0 0.0
  %46 = vmatprep.subr.mxu0 0.0
  %47 = vmatpush1.msra.mxu0 0.0
  %48 = vmatprep.subr.mxu0 0.0
  %49 = vmatpush1.msra.mxu0 0.0
  %50 = vmatprep.subr.mxu0 0.0
  %51 = vmatpush1.msra.mxu0 0.0
  %52 = vmatprep.subr.mxu0 0.0
  %53 = vmatpush1.msra.mxu0 0.0
  %54 = vmatprep.subr.mxu0 0.0
  %55 = vmatpush1.msra.mxu0 0.0
  %56 = vmatprep.subr.mxu0 0.0
  %57 = vmatpush1.msra.mxu0 0.0
  %58 = vmatprep.subr.mxu0 0.0
  %59 = vmatpush1.msra.mxu0 0.0
  %60 = vmatprep.subr.mxu0 0.0
  %61 = vmatpush1.msra.mxu0 0.0
  %62 = vmatprep.subr.mxu0 0.0
  %63 = vmatpush1.msra.mxu0 %v26
  %64 = vmatprep.subr.mxu0 0.0
  %65 = vmatpush1.msra.mxu0 %v25
  %66 = vmatprep.subr.mxu0 0.0
  %67 = vmatpush1.msra.mxu0 %v24
  %68 = vmatprep.subr.mxu0 0.0
  %69 = vmatpush1.msra.mxu0 %v23
  %70 = vmatprep.subr.mxu0 0.0
  %71 = vmatpush2.msra.mxu0 0.0
  %72 = vmatprep.subr.mxu0 0.0
  %73 = vmatpush2.msra.mxu0 0.0
  %74 = vmatprep.subr.mxu0 0.0
  %75 = vmatpush2.msra.mxu0 0.0
  %76 = vmatprep.subr.mxu0 0.0
  %77 = vmatpush2.msra.mxu0 0.0
  %78 = vmatprep.subr.mxu0 0.0
  %79 = vmatpush2.msra.mxu0 0.0
  %80 = vmatprep.subr.mxu0 0.0
  %81 = vmatpush2.msra.mxu0 0.0
  %82 = vmatprep.subr.mxu0 0.0
  %83 = vmatpush2.msra.mxu0 0.0
  %84 = vmatprep.subr.mxu0 0.0
  %85 = vmatpush2.msra.mxu0 0.0
  %86 = vmatprep.subr.mxu0 0.0
  %87 = vmatpush2.msra.mxu0 0.0
  %88 = vmatprep.subr.mxu0 0.0
  %89 = vmatpush2.msra.mxu0 0.0
  %90 = vmatprep.subr.mxu0 0.0
  %91 = vmatpush2.msra.mxu0 0.0
  %92 = vmatprep.subr.mxu0 0.0
  %93 = vmatpush2.msra.mxu0 0.0
  %94 = vmatprep.subr.mxu0 0.0
  %95 = vmatpush2.msra.mxu0 0.0
  %96 = vmatprep.subr.mxu0 0.0
  %97 = vmatpush2.msra.mxu0 0.0
  %98 = vmatprep.subr.mxu0 0.0
  %99 = vmatpush2.msra.mxu0 0.0
  %100 = vmatprep.subr.mxu0 0.0
  %101 = vmatpush2.msra.mxu0 0.0
  %102 = vmatprep.mubr.f32.mxu0 0.0
  %103 = vmatmul.mubr.f32.gmra.mxu0 %v36
  %v104 = vpop.f32.mrf.mxu0
  %v105 = vadd.f32 %v32, %v104
  %v106 = vpop.f32.mrf.mxu0
  %107 = vdwg.mxu0
  %v108 = vtanh.pop %v105
  %v109 = vmul.f32 %v108, 0.5
  %v110 = vadd.f32 %v109, 0.5
  %112 = vrot.lane.b32.xlu0 %v110, 112
  %v113 = vpop.permute.xlu0 %112
  %v115 = vmul.f32 %v108, %v113
  %v116 = vld [vmem:[%s3] sm:$0x1]
  %v118 = vlaneseq
  %v119 = vshrl.u32 %v118, 7
  %v120 = vsub.s32 0, %v119
  %v121 = vrot.slane %v116, %v120
  %v123 = vmul.f32 %v115, %v121
  %vm124 = vcmask 130048
  %v125 = vsel %vm124, %v123, 0.0
  %126 = vadd.xlane.f32.xlu0 %v125
  %v127 = vpop.xlane.xlu0 %126
  %v128 = vld [vmem:[#allocation2] sm:$0x1]
  %v130 = vlaneseq
  %v131 = vshrl.u32 %v130, 7
  %v132 = vsub.s32 0, %v131
  %v133 = vrot.slane %v128, %v132
  %v135 = vadd.f32 %v127, %v133
  %vm136 = vcmask 7168
  %137 = vst.msk [vmem:[%s5] sm:$0xff] %vm136, %v135
  // Predicated region
  $region22: #{gated_attention_forward.1} parent=0 // pred_check
    _
  $region23: #{gated_attention_forward.1} parent=0 // pred_check_branch
    %139 = sbr.rel (0) target = $region25
  $region24: #{gated_attention_forward.1} parent=0 // pred_region
    _
  $region25: #{gated_attention_forward.1} parent=0 // pred_fallthru
    _
  // Predicated region
  $region26: #{gated_attention_forward.1} parent=0 // pred_check
    _
  $region27: #{gated_attention_forward.1} parent=0 // pred_check_branch
    %141 = sbr.rel (0) target = $region29
  $region28: #{gated_attention_forward.1} parent=0 // pred_region
    _
  $region29: #{gated_attention_forward.1} parent=0 // pred_fallthru
    _

</llo_original>
